<compile_context>
chip_gen: v6e
topology: v6e:2x2x1
jax: 0.10.0
libtpu: 0.0.40
codegen_flags: <defaults>
</compile_context>

<pallas_src>
import functools

import jax
import jax.numpy as jnp
from jax.experimental import pallas as pl
from jax.experimental.pallas import tpu as pltpu

_LANE = 128
_ALIGN = 256  # node-count padding: tiles always divide, row axis has >=2 tiles


def _vmem_limit_bytes():
    """Generation-aware VMEM budget: ~75% of capacity (96 MiB v5e/v6e, 48 MiB v7x)."""
    cap = 64 * 1024 * 1024
    try:
        cap = int(pltpu.get_tpu_info().vmem_capacity_bytes)
    except Exception:
        pass
    return min(cap * 3 // 4, 100 * 1024 * 1024)


def _largest_div(n, candidates, cap=None):
    for t in candidates:
        if (cap is None or t <= cap) and n % t == 0:
            return t
    return None


# --------------------------------------------------------------------------- kernels
def _linear_kernel(x_ref, w_ref, o_ref, acc_ref):
    """o = x @ W_pad (bf16 MXU inputs, f32 accumulation over F tiles)."""
    kk = pl.program_id(1)

    @pl.when(kk == 0)
    def _():
        acc_ref[...] = jnp.zeros_like(acc_ref)

    acc_ref[...] += jnp.dot(x_ref[...], w_ref[...],
                            preferred_element_type=jnp.float32)

    @pl.when(kk == pl.num_programs(1) - 1)
    def _():
        o_ref[...] = acc_ref[...].astype(o_ref.dtype)


def _propagate_kernel(adj_ref, h_ref, o_ref, acc_ref, *, tk):
    """One SGC hop: o = adj @ h.  adj tiled (rows i, reduction kk); h VMEM-resident."""
    kk = pl.program_id(1)

    @pl.when(kk == 0)
    def _():
        acc_ref[...] = jnp.zeros_like(acc_ref)

    a = adj_ref[...].astype(jnp.bfloat16)
    start = pl.multiple_of(kk * tk, tk)
    h = h_ref[pl.ds(start, tk), :]                       # bf16, resident block
    acc_ref[...] += jnp.dot(a, h, preferred_element_type=jnp.float32)

    @pl.when(kk == pl.num_programs(1) - 1)
    def _():
        o_ref[...] = acc_ref[...].astype(o_ref.dtype)


def _fused_propagate_kernel(adj_ref, h0_ref, o_ref, adj_bf_ref, buf_ref, *, k):
    """All k hops with adj VMEM-resident and a bf16 ping-pong scratch for h."""
    if adj_ref.dtype == jnp.bfloat16:
        a_ref = adj_ref
    else:
        adj_bf_ref[...] = adj_ref[...].astype(jnp.bfloat16)   # cast once, in VMEM
        a_ref = adj_bf_ref

    buf_ref[0] = h0_ref[...]
    for hop in range(k - 1):                                  # static, k is small
        src = hop % 2
        buf_ref[1 - src] = jnp.dot(
            a_ref[...], buf_ref[src],
            preferred_element_type=jnp.float32).astype(jnp.bfloat16)
    o_ref[...] = jnp.dot(a_ref[...], buf_ref[(k - 1) % 2],
                         preferred_element_type=jnp.float32)


# --------------------------------------------------------------------------- wrappers
def _linear(x_bf16, w_bf16, *, out_dtype, vmem_limit):
    n, f = x_bf16.shape
    c_pad = w_bf16.shape[1]
    tm = _largest_div(n, (1024, 512, 256, 128), cap=max(n // 2, 128))
    tf = _largest_div(f, (2048, 1024, 512, 256, 128)) or f
    out_bytes = jnp.dtype(out_dtype).itemsize
    return pl.pallas_call(
        _linear_kernel,
        out_shape=jax.ShapeDtypeStruct((n, c_pad), out_dtype),
        grid_spec=pltpu.PrefetchScalarGridSpec(
            num_scalar_prefetch=0,
            grid=(n // tm, pl.cdiv(f, tf)),
            in_specs=[
                pl.BlockSpec((tm, tf), lambda i, kk: (i, kk)),
                pl.BlockSpec((tf, c_pad), lambda i, kk: (kk, 0)),
            ],
            out_specs=pl.BlockSpec((tm, c_pad), lambda i, kk: (i, 0)),
            scratch_shapes=[pltpu.VMEM((tm, c_pad), jnp.float32)],
        ),
        compiler_params=pltpu.CompilerParams(
            dimension_semantics=("parallel", "arbitrary"),
            vmem_limit_bytes=vmem_limit,
        ),
        cost_estimate=pl.CostEstimate(
            flops=2 * n * f * c_pad, transcendentals=0,
            bytes_accessed=n * f * 2 + f * c_pad * 2 + n * c_pad * out_bytes),
    )(x_bf16, w_bf16)


def _propagate(adj, h_bf16, *, out_dtype, vmem_limit):
    n = adj.shape[0]
    c_pad = h_bf16.shape[1]
    adj_bytes = jnp.dtype(adj.dtype).itemsize
    out_bytes = jnp.dtype(out_dtype).itemsize

    tm = _largest_div(n, (1024, 512, 256, 128), cap=max(n // 2, 128))
    tk = _largest_div(n, (2048, 1024, 512, 256, 128))
    budget = int(vmem_limit * 0.7)

    def est(tm_, tk_):
        return (2 * tm_ * tk_ * adj_bytes        # adj tile, double-buffered
                + 2 * n * c_pad * 2              # resident h (worst case 2 bufs)
                + 2 * tm_ * c_pad * out_bytes    # out tile, double-buffered
                + tm_ * c_pad * 4)               # f32 accumulator

    while est(tm, tk) > budget and tk > 256:
        tk //= 2
    while est(tm, tk) > budget and tm > 128:
        tm //= 2

    return pl.pallas_call(
        functools.partial(_propagate_kernel, tk=tk),
        out_shape=jax.ShapeDtypeStruct((n, c_pad), out_dtype),
        grid_spec=pltpu.PrefetchScalarGridSpec(
            num_scalar_prefetch=0,
            grid=(n // tm, n // tk),
            in_specs=[
                pl.BlockSpec((tm, tk), lambda i, kk: (i, kk)),   # adj tile
                pl.BlockSpec((n, c_pad), lambda i, kk: (0, 0)),  # h fully resident
            ],
            out_specs=pl.BlockSpec((tm, c_pad), lambda i, kk: (i, 0)),
            scratch_shapes=[pltpu.VMEM((tm, c_pad), jnp.float32)],
        ),
        compiler_params=pltpu.CompilerParams(
            dimension_semantics=("parallel", "arbitrary"),
            vmem_limit_bytes=vmem_limit,
        ),
        cost_estimate=pl.CostEstimate(
            flops=2 * n * n * c_pad, transcendentals=0,
            bytes_accessed=n * n * adj_bytes + n * c_pad * 2 + n * c_pad * out_bytes),
    )(adj, h_bf16)


def _fused_fits(n, c_pad, adj_dtype, vmem_limit):
    adj_bytes = jnp.dtype(adj_dtype).itemsize
    need = 2 * n * n * adj_bytes                 # adj block (double-buffer worst case)
    if adj_dtype != jnp.bfloat16:
        need += 2 * n * n                        # bf16 adj copy in scratch
    need += 2 * n * c_pad * 2                    # h0 input block
    need += 2 * n * c_pad * 4                    # f32 output block
    need += 2 * 2 * n * c_pad                    # bf16 ping-pong scratch
    need += 2 * 4 * n * c_pad                    # headroom for f32 dot temporaries
    return need <= int(vmem_limit * 0.8)


def _propagate_fused(adj, h0_bf16, *, k, vmem_limit):
    n = adj.shape[0]
    c_pad = h0_bf16.shape[1]
    adj_bytes = jnp.dtype(adj.dtype).itemsize
    adj_scratch = (8, 128) if adj.dtype == jnp.bfloat16 else (n, n)
    return pl.pallas_call(
        functools.partial(_fused_propagate_kernel, k=k),
        out_shape=jax.ShapeDtypeStruct((n, c_pad), jnp.float32),
        grid_spec=pltpu.PrefetchScalarGridSpec(
            num_scalar_prefetch=0,
            grid=(1,),
            in_specs=[
                pl.BlockSpec((n, n), lambda i: (0, 0)),
                pl.BlockSpec((n, c_pad), lambda i: (0, 0)),
            ],
            out_specs=pl.BlockSpec((n, c_pad), lambda i: (0, 0)),
            scratch_shapes=[
                pltpu.VMEM(adj_scratch, jnp.bfloat16),
                pltpu.VMEM((2, n, c_pad), jnp.bfloat16),
            ],
        ),
        compiler_params=pltpu.CompilerParams(
            dimension_semantics=("arbitrary",),
            vmem_limit_bytes=vmem_limit,
        ),
        cost_estimate=pl.CostEstimate(
            flops=2 * k * n * n * c_pad, transcendentals=0,
            bytes_accessed=n * n * adj_bytes + n * c_pad * 2 + n * c_pad * 4),
    )(adj, h0_bf16)


def sgc_forward(features, adj, params, *, k, allow_fused=True):
    """SGC forward: out = (adj^k @ X) @ W + b  ==  adj^k @ (X @ W) + b."""
    w, b = params["weight"], params["bias"]          # w: [F, C], b: [C]
    n, f = features.shape
    c = w.shape[1]
    c_pad = ((c + _LANE - 1) // _LANE) * _LANE
    vmem_limit = _vmem_limit_bytes()

    # Pad node count so tiles divide evenly and the parallel row axis always has
    # >= 2 tiles (v7x megacore).  Zero adj rows/cols + zero feature rows is exact.
    n_pad = ((n + _ALIGN - 1) // _ALIGN) * _ALIGN
    if n_pad != n:
        features = jnp.pad(features, ((0, n_pad - n), (0, 0)))
        adj = jnp.pad(adj, ((0, n_pad - n), (0, n_pad - n)))

    # bf16 MXU operands (f32 accumulation in-kernel); class dim padded lane-dense.
    x_bf16 = features.astype(jnp.bfloat16)
    w_bf16 = jnp.zeros((f, c_pad), jnp.bfloat16).at[:, :c].set(w.astype(jnp.bfloat16))

    # Projection first: every N^2 matmul then runs at width c_pad (=128) instead of F.
    h_dtype = jnp.bfloat16 if k >= 1 else jnp.float32
    h = _linear(x_bf16, w_bf16, out_dtype=h_dtype, vmem_limit=vmem_limit)

    if k >= 1:
        if allow_fused and _fused_fits(n_pad, c_pad, adj.dtype, vmem_limit):
            # adj VMEM-resident: a single HBM read of adj covers all k hops.
            h = _propagate_fused(adj, h, k=k, vmem_limit=vmem_limit)
        else:
            # Per-hop path.  Pre-casting adj to bf16 in HBM only pays off when adj
            # is re-read >= 3 times; otherwise cast per tile inside the kernel.
            # TODO(synk): SGConv(cached=True) would also reuse adj^k X across calls;
            # callers may pass an already-bf16 adj to skip the cast entirely.
            if k >= 3 and adj.dtype != jnp.bfloat16:
                adj = adj.astype(jnp.bfloat16)
            for hop in range(k):
                out_dtype = jnp.float32 if hop == k - 1 else jnp.bfloat16
                h = _propagate(adj, h, out_dtype=out_dtype, vmem_limit=vmem_limit)

    # Bias added once on the narrow unpadded slice (exact: propagation is linear).
    return h[:n, :c].astype(jnp.float32) + b[None, :]


# --------------------------------------------------------------------------- references
def _reference_kernel_numerics(features, adj, w, b, k):
    """Mirrors kernel numerics: bf16 MXU inputs, f32 accumulation, bf16 mid-hops."""
    hi = jax.lax.Precision.HIGHEST
    bf = lambda x: x.astype(jnp.bfloat16).astype(jnp.float32)
    h = jnp.dot(bf(features), bf(w), precision=hi)
    if k >= 1:
        h = bf(h)
        a = bf(adj)
        for hop in range(k):
            h = jnp.dot(a, h, precision=hi)
            if hop < k - 1:
                h = bf(h)
    return h + b


def _reference_canonical(features, adj, w, b, k):
    """Pure-f32 canonical SGC: (adj^k X) W + b."""
    hi = jax.lax.Precision.HIGHEST
    h = features
    for _ in range(k):
        h = jnp.dot(adj, h, precision=hi)
    return jnp.dot(h, w, precision=hi) + b


# --------------------------------------------------------------------------- demo
if __name__ == "__main__":
    # Small graph: 256 nodes, 256 input features, 7 classes, k=2 propagation hops.
    N, F, C, K = 256, 256, 7, 2
    key = jax.random.PRNGKey(0)
    k_x, k_a, k_w, k_b = jax.random.split(key, 4)

    features = jax.random.normal(k_x, (N, F), jnp.float32)

    # Symmetrically normalized adjacency with self loops: D^-1/2 (A + I) D^-1/2.
    # TODO(synk): self.g is a DGL graph object; its sparse message passing is
    # represented here by a dense normalized adjacency (dense MXU matmul, not SpMM).
    a = (jax.random.uniform(k_a, (N, N)) > 0.9).astype(jnp.float32)
    a = jnp.maximum(a, a.T) + jnp.eye(N, dtype=jnp.float32)
    d_inv_sqrt = 1.0 / jnp.sqrt(jnp.sum(a, axis=1))
    adj = a * d_inv_sqrt[:, None] * d_inv_sqrt[None, :]

    params = {
        "weight": jax.random.normal(k_w, (F, C), jnp.float32) / jnp.sqrt(F),
        "bias": jax.random.normal(k_b, (C,), jnp.float32) * 0.1,
    }

    ref_k = _reference_kernel_numerics(features, adj, params["weight"], params["bias"], K)
    ref_c = _reference_canonical(features, adj, params["weight"], params["bias"], K)

    # Fused path (adj VMEM-resident for all K hops) — the default for graphs that fit.
    out_fused = jax.block_until_ready(sgc_forward(features, adj, params, k=K))
    assert out_fused.shape == (N, C)
    assert jnp.allclose(out_fused, ref_k, atol=3e-3, rtol=3e-3), "fused vs bf16-aware ref"
    assert jnp.allclose(out_fused, ref_c, atol=1e-1, rtol=1e-1), "fused vs canonical f32 ref"

    # Per-hop path (used when adj does not fit VMEM) — exercised explicitly.
    out_hops = jax.block_until_ready(
        sgc_forward(features, adj, params, k=K, allow_fused=False))
    assert out_hops.shape == (N, C)
    assert jnp.allclose(out_hops, ref_k, atol=3e-3, rtol=3e-3), "per-hop vs bf16-aware ref"
    assert jnp.allclose(out_hops, ref_c, atol=1e-1, rtol=1e-1), "per-hop vs canonical f32 ref"

    # k == 0 path (pure linear projection + bias).
    out_lin = jax.block_until_ready(sgc_forward(features, adj, params, k=0))
    ref_lin = _reference_kernel_numerics(features, adj, params["weight"], params["bias"], 0)
    assert jnp.allclose(out_lin, ref_lin, atol=3e-3, rtol=3e-3), "k=0 linear path"

    print("KERNEL_OK")
</pallas_src>

<mosaic_0001>
module attributes {stable_mosaic.version = 11 : i64} {
  func.func @_linear_kernel(%arg0: i32, %arg1: i32, %arg2: memref<128x256xbf16, #tpu.memory_space<vmem>>, %arg3: memref<256x128xbf16, #tpu.memory_space<vmem>>, %arg4: memref<128x128xbf16, #tpu.memory_space<vmem>>, %arg5: memref<128x128xf32, #tpu.memory_space<vmem>>) attributes {dimension_semantics = [#tpu.dimension_semantics<parallel>, #tpu.dimension_semantics<arbitrary>], iteration_bounds = array<i64: 2, 1>, scalar_prefetch = 0 : i64, scratch_operands = 1 : i64, tpu.core_type = #tpu.core_type<tc>, window_params = [{transform_indices = @transform_0, window_bounds = array<i64: 128, 256>}, {transform_indices = @transform_1, window_bounds = array<i64: 256, 128>}, {transform_indices = @transform_2, window_bounds = array<i64: 128, 128>}]} {
    %c0_i32 = arith.constant 0 : i32
    %0 = arith.cmpi eq, %arg1, %c0_i32 : i32
    %1 = arith.extui %0 : i1 to i32
    %c0_i32_0 = arith.constant 0 : i32
    %2 = arith.cmpi ne, %1, %c0_i32_0 : i32
    scf.if %2 {
      %cst_10 = arith.constant 0.000000e+00 : f32
      %12 = vector.broadcast %cst_10 : f32 to vector<128x128xf32>
      %c0_11 = arith.constant 0 : index
      %c0_12 = arith.constant 0 : index
      %13 = vector.load %arg5[%c0_11, %c0_12] : memref<128x128xf32, #tpu.memory_space<vmem>>, vector<128x128xf32>
      tpu.vector_store %arg5[%c0_11, %c0_12], %12 {strides = array<i32>} : memref<128x128xf32, #tpu.memory_space<vmem>>, vector<128x128xf32>,
    } else {
    }
    %c0 = arith.constant 0 : index
    %c0_1 = arith.constant 0 : index
    %3 = vector.load %arg5[%c0, %c0_1] : memref<128x128xf32, #tpu.memory_space<vmem>>, vector<128x128xf32>
    %c0_2 = arith.constant 0 : index
    %c0_3 = arith.constant 0 : index
    %4 = vector.load %arg2[%c0_2, %c0_3] : memref<128x256xbf16, #tpu.memory_space<vmem>>, vector<128x256xbf16>
    %c0_4 = arith.constant 0 : index
    %c0_5 = arith.constant 0 : index
    %5 = vector.load %arg3[%c0_4, %c0_5] : memref<256x128xbf16, #tpu.memory_space<vmem>>, vector<256x128xbf16>
    %cst = arith.constant dense<0.000000e+00> : vector<128x128xf32>
    %6 = tpu.matmul %4, %5, %cst {dimension_numbers = #tpu.dot_dimension_numbers<[1], [0], [0], [1], [0, 0, 1, 1], [], []>} : vector<128x256xbf16>, vector<256x128xbf16>, vector<128x128xf32> -> vector<128x128xf32>
    %7 = arith.addf %3, %6 : vector<128x128xf32>
    %c0_6 = arith.constant 0 : index
    %c0_7 = arith.constant 0 : index
    %8 = vector.load %arg5[%c0_6, %c0_7] : memref<128x128xf32, #tpu.memory_space<vmem>>, vector<128x128xf32>
    tpu.vector_store %arg5[%c0_6, %c0_7], %7 {strides = array<i32>} : memref<128x128xf32, #tpu.memory_space<vmem>>, vector<128x128xf32>,
    %c0_i32_8 = arith.constant 0 : i32
    %9 = arith.cmpi eq, %arg1, %c0_i32_8 : i32
    %10 = arith.extui %9 : i1 to i32
    %c0_i32_9 = arith.constant 0 : i32
    %11 = arith.cmpi ne, %10, %c0_i32_9 : i32
    scf.if %11 {
      %c0_10 = arith.constant 0 : index
      %c0_11 = arith.constant 0 : index
      %12 = vector.load %arg5[%c0_10, %c0_11] : memref<128x128xf32, #tpu.memory_space<vmem>>, vector<128x128xf32>
      %13 = arith.truncf %12 : vector<128x128xf32> to vector<128x128xbf16>
      %c0_12 = arith.constant 0 : index
      %c0_13 = arith.constant 0 : index
      %14 = vector.load %arg4[%c0_12, %c0_13] : memref<128x128xbf16, #tpu.memory_space<vmem>>, vector<128x128xbf16>
      tpu.vector_store %arg4[%c0_12, %c0_13], %13 {strides = array<i32>} : memref<128x128xbf16, #tpu.memory_space<vmem>>, vector<128x128xbf16>,
    } else {
    }
    return
  }
  func.func @transform_0(%arg0: i32, %arg1: i32) -> (i32, i32) {
    %c0_i32 = arith.constant 0 : i32
    return %arg0, %arg1 : i32, i32
  }
  func.func @transform_1(%arg0: i32, %arg1: i32) -> (i32, i32) {
    %c0_i32 = arith.constant 0 : i32
    %c0_i32_0 = arith.constant 0 : i32
    return %arg1, %c0_i32 : i32, i32
  }
  func.func @transform_2(%arg0: i32, %arg1: i32) -> (i32, i32) {
    %c0_i32 = arith.constant 0 : i32
    %c0_i32_0 = arith.constant 0 : i32
    return %arg0, %c0_i32 : i32, i32
  }
}

</mosaic_0001>

<llo_original>
// kernel: tpu_custom_call.1
$region0: #{tpu_custom_call.1}
  #allocation0 [shape = 'u32[]', space=smem, size = 0x4, offset = 0x4, fixed_abs, tag = 'smem constant byte address 0x4 - core index']
  #allocation1 [shape = 'u32[144,128]{1,0:T(1,128)}', space=vmem, size = 0x12000, scoped, tag = 'internal scratch']
  #allocation2 [shape = 'f32[128,128]{1,0:T(8,128)}', space=vmem, size = 0x10000, scoped, tag = 'scratch operand']
  %s0 = inlined_call_operand.hbm [shape: bf16[256,256], index: 0, kind: input, shape index: {}]
  %s1 = inlined_call_operand.hbm [shape: bf16[256,128], index: 1, kind: input, shape index: {}]
  %s2 = inlined_call_operand.hbm [shape: bf16[256,128], index: 2, kind: output, shape index: {}]
  %s3 = sld [smem:[#allocation0]]
  $region57: #{tpu_custom_call.1} parent=0
    _
  %s5 = ssub.s32 1, %s3
  %s6 = scalar_select 0, %s5, %s3
  $region1: #{tpu_custom_call.1} parent=0
    #allocation3 [shape = 'u8[131072]{0}', space=vmem, size = 0x20000, scoped, tag = 'input window, operand 0']
    #allocation4 [shape = 's32[2]{0}', space=sflag, size = 0x8, scoped, tag = 'scoped memory for tpu_custom_call.1']
    #allocation5 [shape = 's32[2]{0}', space=sflag, size = 0x8, scoped, tag = 'scoped memory for tpu_custom_call.1']
    #allocation6 [shape = 'u8[65536]{0}', space=vmem, size = 0x10000, scoped, tag = 'input window, operand 1, single buffered']
    #allocation7 [shape = 's32[1]{0}', space=sflag, size = 0x4, scoped, tag = 'scoped memory for tpu_custom_call.1']
    #allocation8 [shape = 'u8[65536]{0}', space=vmem, size = 0x10000, scoped, tag = 'output window, operand 0']
    %7 = vsyncpa [#allocation4], 0
    %s8 = scalar_lea.sflag [#allocation4], 1
    %9 = vsyncpa %s8, 0
    %10 = vsyncpa [#allocation7], 0
    %11 = vsyncpa [#allocation5], 0
    %s12 = scalar_lea.sflag [#allocation5], 1
    %13 = vsyncpa %s12, 0
    loop: start=0, step=1, limit=4
    $region2: #{tpu_custom_call.1} parent=1 // loop_pre_header
      _
    $region3: #{tpu_custom_call.1} parent=1 // loop_header
      %s15 = sphi 0, %s19
      %p16 = scmp.ge.s32.totalorder %s15, 4
      %s22 = sphi 0, %s34
      %s23 = sphi 0, %s30
      %s24 = sphi 0, %s22
      %s25 = sphi 0, %s23
      %s26 = sphi 0, %s24
      %s27 = sphi 0, %s25
      %s39 = sphi 0, %s41
      %s42 = sphi 0, %s39
      %s43 = sphi 0, %s42
      %s59 = sphi 0, %s43
      %s65 = sphi 0, %s67
      %s68 = sphi 0, %s65
      %s69 = sphi 0, %s68
      %s85 = sphi 0, %s69
      %s91 = sphi 0, %s93
      %s94 = sphi 0, %s91
      %s95 = sphi 0, %s94
      %s111 = sphi 0, %s95
    $region4: #{tpu_custom_call.1} parent=1 // loop_header_branch
      %18 = sbr.rel (%p16) target = $region8
    $region5: #{tpu_custom_call.1} parent=1 // loop_body
      %s20 = ssub.s32 %s15, 1
      %s21 = ssub.s32 %s15, 2
      %s28 = sadd.s32 1, %s23
      %p29 = scmp.ge.s32.totalorder %s28, 1
      %s30 = scalar_select %p29, 0, %s28
      %s31 = sadd.s32 1, %s22
      %s32 = scalar_select %p29, %s31, %s22
      %p33 = scmp.ge.s32.totalorder %s32, 2
      %s34 = scalar_select %p33, 0, %s32
      %s35 = ssub.s32 %s22, %s34
      %s36 = ssub.s32 %s23, %s30
      %s37 = sor.u32 %s35, %s36
      %p38 = scmp.eq.s32.totalorder %s37, 0
      %s40 = sadd.s32 %s39, 1
      %s41 = scalar_select %p38, %s39, %s40
      %p44 = pneg %p38
      %p45 = scmp.eq.s32.totalorder %s15, 1
      %p46 = por %p44, %p45
      %p47 = scmp.ne.s32.totalorder %s39, %s42
      %p48 = scmp.eq.s32.totalorder %s15, 0
      %p49 = por %p47, %p48
      %p50 = scmp.ne.s32.totalorder %s39, %s42
      %p51 = scmp.eq.s32.totalorder %s20, 1
      %p52 = por %p50, %p51
      %p53 = scmp.ne.s32.totalorder %s42, %s43
      %p54 = scmp.eq.s32.totalorder %s20, 0
      %p55 = por %p53, %p54
      %p56 = scmp.ne.s32.totalorder %s42, %s43
      %p57 = scmp.eq.s32.totalorder %s21, 1
      %p58 = por %p56, %p57
      %p60 = scmp.ne.s32.totalorder %s43, %s59
      %p61 = scmp.eq.s32.totalorder %s21, 0
      %p62 = por %p60, %p61
      %s63 = ssub.s32 %s23, %s30
      %p64 = scmp.eq.s32.totalorder %s63, 0
      %s66 = sadd.s32 %s65, 1
      %s67 = scalar_select %p64, %s65, %s66
      %p70 = pneg %p64
      %p71 = scmp.eq.s32.totalorder %s15, 1
      %p72 = por %p70, %p71
      %p73 = scmp.ne.s32.totalorder %s65, %s68
      %p74 = scmp.eq.s32.totalorder %s15, 0
      %p75 = por %p73, %p74
      %p76 = scmp.ne.s32.totalorder %s65, %s68
      %p77 = scmp.eq.s32.totalorder %s20, 1
      %p78 = por %p76, %p77
      %p79 = scmp.ne.s32.totalorder %s68, %s69
      %p80 = scmp.eq.s32.totalorder %s20, 0
      %p81 = por %p79, %p80
      %p82 = scmp.ne.s32.totalorder %s68, %s69
      %p83 = scmp.eq.s32.totalorder %s21, 1
      %p84 = por %p82, %p83
      %p86 = scmp.ne.s32.totalorder %s69, %s85
      %p87 = scmp.eq.s32.totalorder %s21, 0
      %p88 = por %p86, %p87
      %s89 = ssub.s32 %s22, %s34
      %p90 = scmp.eq.s32.totalorder %s89, 0
      %s92 = sadd.s32 %s91, 1
      %s93 = scalar_select %p90, %s91, %s92
      %p96 = pneg %p90
      %p97 = scmp.eq.s32.totalorder %s15, 1
      %p98 = por %p96, %p97
      %p99 = scmp.ne.s32.totalorder %s91, %s94
      %p100 = scmp.eq.s32.totalorder %s15, 0
      %p101 = por %p99, %p100
      %p102 = scmp.ne.s32.totalorder %s91, %s94
      %p103 = scmp.eq.s32.totalorder %s20, 1
      %p104 = por %p102, %p103
      %p105 = scmp.ne.s32.totalorder %s94, %s95
      %p106 = scmp.eq.s32.totalorder %s20, 0
      %p107 = por %p105, %p106
      %p108 = scmp.ne.s32.totalorder %s94, %s95
      %p109 = scmp.eq.s32.totalorder %s21, 1
      %p110 = por %p108, %p109
      %p112 = scmp.ne.s32.totalorder %s95, %s111
      %p113 = scmp.eq.s32.totalorder %s21, 0
      %p114 = por %p112, %p113
      %p115 = scmp.le.s32.totalorder 1, %s15
      %p116 = scmp.lt.s32.totalorder %s15, 3
      %p117 = pnand %p115, %p116
      %p118 = pneg %p117
      // Predicated region
      $region9: #{tpu_custom_call.1} parent=5 // pred_check
        _
      $region10: #{tpu_custom_call.1} parent=5 // pred_check_branch
        %120 = sbr.rel (%p117) target = $region12
      $region11: #{tpu_custom_call.1} parent=5 // pred_region
        %s121 = ssub.s32 %s15, 1
        // Predicated region
        $region13: #{tpu_custom_call.1} parent=11 // pred_check
          %p122 = pneg %p81
        $region14: #{tpu_custom_call.1} parent=11 // pred_check_branch
          %124 = sbr.rel (%p122) target = $region16
        $region15: #{tpu_custom_call.1} parent=11 // pred_region
          %s125 = smul.u32 32, %s25
          %s127 = ssub.s32 2048, 2048
          %128 = vsyncadd [#allocation7], %s127
          %s129 = smul.addr %s125, 64
          %s130 = scalar_lea.hbm %s1, %s129
          %s131 = sshll.u32 [#allocation6], 4
          %s132 = int_to_ptr.vmem [resolvable:$true] %s131
          %137 = dma.hbm_to_vmem [thread:$0]  %s130, 2048, %s132, [#allocation7], 64, 64, 4
        $region16: #{tpu_custom_call.1} parent=11 // pred_fallthru
          _
      $region12: #{tpu_custom_call.1} parent=5 // pred_fallthru
        _
      %p138 = scmp.lt.s32.totalorder %s15, 2
      // Predicated region
      $region17: #{tpu_custom_call.1} parent=5 // pred_check
        %p139 = pneg %p138
      $region18: #{tpu_custom_call.1} parent=5 // pred_check_branch
        %141 = sbr.rel (%p139) target = $region20
      $region19: #{tpu_custom_call.1} parent=5 // pred_region
        // Predicated region
        $region21: #{tpu_custom_call.1} parent=19 // pred_check
          %p142 = pneg %p49
        $region22: #{tpu_custom_call.1} parent=19 // pred_check_branch
          %144 = sbr.rel (%p142) target = $region24
        $region23: #{tpu_custom_call.1} parent=19 // pred_region
          %s145 = sand.u32 %s39, 1
          %s146 = scalar_lea.sflag [#allocation4], %s145
          %s147 = sand.u32 %s39, 1
          %s148 = smul.addr %s147, 128
          %s149 = scalar_lea.vmem [#allocation3], %s148
          %s150 = smul.u32 16, %s22
          %s151 = smul.u32 2, %s23
          %s153 = ssub.s32 2048, 2048
          %154 = vsyncadd %s146, %s153
          %s155 = smul.addr %s150, 2
          %s156 = sadd.s32 %s151, %s155
          %s157 = smul.addr %s156, 64
          %s158 = scalar_lea.hbm %s0, %s157
          %s159 = sshll.u32 %s149, 4
          %s160 = int_to_ptr.vmem [resolvable:$true] %s159
          %165 = dma.hbm_to_vmem [thread:$0]  %s158, 2048, %s160, %s146, 128, 128, 8
        $region24: #{tpu_custom_call.1} parent=19 // pred_fallthru
          _
      $region20: #{tpu_custom_call.1} parent=5 // pred_fallthru
        _
      %p166 = scmp.le.s32.totalorder 1, %s15
      %p167 = scmp.lt.s32.totalorder %s15, 3
      %p168 = pnand %p166, %p167
      %p169 = pneg %p168
      // Predicated region
      $region25: #{tpu_custom_call.1} parent=5 // pred_check
        _
      $region26: #{tpu_custom_call.1} parent=5 // pred_check_branch
        %171 = sbr.rel (%p168) target = $region28
      $region27: #{tpu_custom_call.1} parent=5 // pred_region
        %s172 = ssub.s32 %s15, 1
        %s173 = sand.u32 %s42, 1
        %s174 = scalar_lea.sflag [#allocation4], %s173
        %s175 = sand.u32 %s42, 1
        %s176 = smul.addr %s175, 128
        %s177 = scalar_lea.vmem [#allocation3], %s176
        // Predicated region
        $region29: #{tpu_custom_call.1} parent=27 // pred_check
          %p178 = pneg %p55
        $region30: #{tpu_custom_call.1} parent=27 // pred_check_branch
          %180 = sbr.rel (%p178) target = $region32
        $region31: #{tpu_custom_call.1} parent=27 // pred_region
          %181 = dma.done %s174, 2048
        $region32: #{tpu_custom_call.1} parent=27 // pred_fallthru
          _
        // Predicated region
        $region33: #{tpu_custom_call.1} parent=27 // pred_check
          %p182 = pneg %p81
        $region34: #{tpu_custom_call.1} parent=27 // pred_check_branch
          %184 = sbr.rel (%p182) target = $region36
        $region35: #{tpu_custom_call.1} parent=27 // pred_region
          %185 = dma.done [#allocation7], 2048
        $region36: #{tpu_custom_call.1} parent=27 // pred_fallthru
          _
        %s186 = sand.u32 %s42, 1
        %s187 = scalar_lea.sflag [#allocation4], %s186
        %s188 = sand.u32 %s42, 1
        %s189 = smul.addr %s188, 128
        %s190 = scalar_lea.vmem [#allocation3], %s189
        %p191 = pneg %p55
        %p192 = pneg %p52
        %p193 = pneg %p81
        %p194 = pneg %p78
        %p195 = pneg %p107
        %p196 = pneg %p104
        %s197 = sand.u32 %s94, 1
        %s198 = scalar_lea.sflag [#allocation5], %s197
        %s199 = sand.u32 %s94, 1
        %s200 = smul.addr %s199, 64
        %s201 = scalar_lea.vmem [#allocation8], %s200
        %s202 = smul.u32 16, %s24
        %s203 = smul.u32 2, %s25
        %s204 = smul.u32 32, %s25
        %s205 = smul.u32 16, %s24
        %p207 = scmp.eq.s32.totalorder %s25, 0
        // Predicated region
        $region37: #{tpu_custom_call.1} parent=27 // pred_check
          %p208 = pneg %p207
        $region38: #{tpu_custom_call.1} parent=27 // pred_check_branch
          %210 = sbr.rel (%p208) target = $region40
        $region39: #{tpu_custom_call.1} parent=27 // pred_region
          %211 = vst [vmem:[#allocation2] sm:$0xff] 0.0
          %212 = vst [vmem:[#allocation2 + $0x8] sm:$0xff] 0.0
          %213 = vst [vmem:[#allocation2 + $0x10] sm:$0xff] 0.0
          %214 = vst [vmem:[#allocation2 + $0x18] sm:$0xff] 0.0
          %215 = vst [vmem:[#allocation2 + $0x20] sm:$0xff] 0.0
          %216 = vst [vmem:[#allocation2 + $0x28] sm:$0xff] 0.0
          %217 = vst [vmem:[#allocation2 + $0x30] sm:$0xff] 0.0
          %218 = vst [vmem:[#allocation2 + $0x38] sm:$0xff] 0.0
          %219 = vst [vmem:[#allocation2 + $0x40] sm:$0xff] 0.0
          %220 = vst [vmem:[#allocation2 + $0x48] sm:$0xff] 0.0
          %221 = vst [vmem:[#allocation2 + $0x50] sm:$0xff] 0.0
          %222 = vst [vmem:[#allocation2 + $0x58] sm:$0xff] 0.0
          %223 = vst [vmem:[#allocation2 + $0x60] sm:$0xff] 0.0
          %224 = vst [vmem:[#allocation2 + $0x68] sm:$0xff] 0.0
          %225 = vst [vmem:[#allocation2 + $0x70] sm:$0xff] 0.0
          %226 = vst [vmem:[#allocation2 + $0x78] sm:$0xff] 0.0
        $region40: #{tpu_custom_call.1} parent=27 // pred_fallthru
          _
        %v227 = vld [vmem:[#allocation2] sm:$0xff]
        %v228 = vld [vmem:[#allocation2 + $0x8] sm:$0xff]
        %v229 = vld [vmem:[#allocation2 + $0x10] sm:$0xff]
        %v230 = vld [vmem:[#allocation2 + $0x18] sm:$0xff]
        %v231 = vld [vmem:[#allocation2 + $0x20] sm:$0xff]
        %v232 = vld [vmem:[#allocation2 + $0x28] sm:$0xff]
        %v233 = vld [vmem:[#allocation2 + $0x30] sm:$0xff]
        %v234 = vld [vmem:[#allocation2 + $0x38] sm:$0xff]
        %v235 = vld [vmem:[#allocation2 + $0x40] sm:$0xff]
        %v236 = vld [vmem:[#allocation2 + $0x48] sm:$0xff]
        %v237 = vld [vmem:[#allocation2 + $0x50] sm:$0xff]
        %v238 = vld [vmem:[#allocation2 + $0x58] sm:$0xff]
        %v239 = vld [vmem:[#allocation2 + $0x60] sm:$0xff]
        %v240 = vld [vmem:[#allocation2 + $0x68] sm:$0xff]
        %v241 = vld [vmem:[#allocation2 + $0x70] sm:$0xff]
        %v242 = vld [vmem:[#allocation2 + $0x78] sm:$0xff]
        %v243 = vld [vmem:[%s177] sm:$0xff]
        %v244 = vld [vmem:[%s177 + $0x8] sm:$0xff]
        %v245 = vld [vmem:[%s177 + $0x10] sm:$0xff]
        %v246 = vld [vmem:[%s177 + $0x18] sm:$0xff]
        %v247 = vld [vmem:[%s177 + $0x20] sm:$0xff]
        %v248 = vld [vmem:[%s177 + $0x28] sm:$0xff]
        %v249 = vld [vmem:[%s177 + $0x30] sm:$0xff]
        %v250 = vld [vmem:[%s177 + $0x38] sm:$0xff]
        %v251 = vld [vmem:[%s177 + $0x40] sm:$0xff]
        %v252 = vld [vmem:[%s177 + $0x48] sm:$0xff]
        %v253 = vld [vmem:[%s177 + $0x50] sm:$0xff]
        %v254 = vld [vmem:[%s177 + $0x58] sm:$0xff]
        %v255 = vld [vmem:[%s177 + $0x60] sm:$0xff]
        %v256 = vld [vmem:[%s177 + $0x68] sm:$0xff]
        %v257 = vld [vmem:[%s177 + $0x70] sm:$0xff]
        %v258 = vld [vmem:[%s177 + $0x78] sm:$0xff]
        %v259 = vld [vmem:[#allocation6] sm:$0xf]
        %v260 = vld [vmem:[#allocation6 + $0x4] sm:$0xf]
        %v261 = vld [vmem:[#allocation6 + $0x8] sm:$0xf]
        %v262 = vld [vmem:[#allocation6 + $0xc] sm:$0xf]
        %v263 = vld [vmem:[#allocation6 + $0x10] sm:$0xf]
        %v264 = vld [vmem:[#allocation6 + $0x14] sm:$0xf]
        %v265 = vld [vmem:[#allocation6 + $0x18] sm:$0xf]
        %v266 = vld [vmem:[#allocation6 + $0x1c] sm:$0xf]
        %v267 = vld [vmem:[#allocation6 + $0x20] sm:$0xf]
        %v268 = vld [vmem:[#allocation6 + $0x24] sm:$0xf]
        %v269 = vld [vmem:[#allocation6 + $0x28] sm:$0xf]
        %v270 = vld [vmem:[#allocation6 + $0x2c] sm:$0xf]
        %v271 = vld [vmem:[#allocation6 + $0x30] sm:$0xf]
        %v272 = vld [vmem:[#allocation6 + $0x34] sm:$0xf]
        %v273 = vld [vmem:[#allocation6 + $0x38] sm:$0xf]
        %v274 = vld [vmem:[#allocation6 + $0x3c] sm:$0xf]
        %v275 = vld [vmem:[#allocation6 + $0x40] sm:$0xf]
        %v276 = vld [vmem:[#allocation6 + $0x44] sm:$0xf]
        %v277 = vld [vmem:[#allocation6 + $0x48] sm:$0xf]
        %v278 = vld [vmem:[#allocation6 + $0x4c] sm:$0xf]
        %v279 = vld [vmem:[#allocation6 + $0x50] sm:$0xf]
        %v280 = vld [vmem:[#allocation6 + $0x54] sm:$0xf]
        %v281 = vld [vmem:[#allocation6 + $0x58] sm:$0xf]
        %v282 = vld [vmem:[#allocation6 + $0x5c] sm:$0xf]
        %v283 = vld [vmem:[#allocation6 + $0x60] sm:$0xf]
        %v284 = vld [vmem:[#allocation6 + $0x64] sm:$0xf]
        %v285 = vld [vmem:[#allocation6 + $0x68] sm:$0xf]
        %v286 = vld [vmem:[#allocation6 + $0x6c] sm:$0xf]
        %v287 = vld [vmem:[#allocation6 + $0x70] sm:$0xf]
        %v288 = vld [vmem:[#allocation6 + $0x74] sm:$0xf]
        %v289 = vld [vmem:[#allocation6 + $0x78] sm:$0xf]
        %v290 = vld [vmem:[#allocation6 + $0x7c] sm:$0xf]
        %v307 = vunpack.c.l.b16 %v243
        %v308 = vunpack.c.h.b16 %v243
        %v309 = vunpack.c.l.b16 %v244
        %v310 = vunpack.c.h.b16 %v244
        %v311 = vunpack.c.l.b16 %v245
        %v312 = vunpack.c.h.b16 %v245
        %v313 = vunpack.c.l.b16 %v246
        %v314 = vunpack.c.h.b16 %v246
        %v315 = vunpack.c.l.b16 %v247
        %v316 = vunpack.c.h.b16 %v247
        %v317 = vunpack.c.l.b16 %v248
        %v318 = vunpack.c.h.b16 %v248
        %v319 = vunpack.c.l.b16 %v249
        %v320 = vunpack.c.h.b16 %v249
        %v321 = vunpack.c.l.b16 %v250
        %v322 = vunpack.c.h.b16 %v250
        %v323 = vunpack.c.l.b16 %v251
        %v324 = vunpack.c.h.b16 %v251
        %v325 = vunpack.c.l.b16 %v252
        %v326 = vunpack.c.h.b16 %v252
        %v327 = vunpack.c.l.b16 %v253
        %v328 = vunpack.c.h.b16 %v253
        %v329 = vunpack.c.l.b16 %v254
        %v330 = vunpack.c.h.b16 %v254
        %v331 = vunpack.c.l.b16 %v255
        %v332 = vunpack.c.h.b16 %v255
        %v333 = vunpack.c.l.b16 %v256
        %v334 = vunpack.c.h.b16 %v256
        %v335 = vunpack.c.l.b16 %v257
        %v336 = vunpack.c.h.b16 %v257
        %v337 = vunpack.c.l.b16 %v258
        %v338 = vunpack.c.h.b16 %v258
        %v339 = vpack.c.b16 %v309, %v307
        %v340 = vpack.c.b16 %v310, %v308
        %v341 = vpack.c.b16 %v313, %v311
        %v342 = vpack.c.b16 %v314, %v312
        %v343 = vpack.c.b16 %v317, %v315
        %v344 = vpack.c.b16 %v318, %v316
        %v345 = vpack.c.b16 %v321, %v319
        %v346 = vpack.c.b16 %v322, %v320
        %v347 = vpack.c.b16 %v325, %v323
        %v348 = vpack.c.b16 %v326, %v324
        %v349 = vpack.c.b16 %v329, %v327
        %v350 = vpack.c.b16 %v330, %v328
        %v351 = vpack.c.b16 %v333, %v331
        %v352 = vpack.c.b16 %v334, %v332
        %v353 = vpack.c.b16 %v337, %v335
        %v354 = vpack.c.b16 %v338, %v336
        %v403 = vunpack.c.l.b16 %v259
        %v404 = vunpack.c.l.b16 %v260
        %v405 = vunpack.c.l.b16 %v261
        %v406 = vunpack.c.l.b16 %v262
        %v407 = vunpack.c.l.b16 %v263
        %v408 = vunpack.c.l.b16 %v264
        %v409 = vunpack.c.l.b16 %v265
        %v410 = vunpack.c.l.b16 %v266
        %v411 = vunpack.c.l.b16 %v267
        %v412 = vunpack.c.l.b16 %v268
        %v413 = vunpack.c.l.b16 %v269
        %v414 = vunpack.c.l.b16 %v270
        %v415 = vunpack.c.l.b16 %v271
        %v416 = vunpack.c.l.b16 %v272
        %v417 = vunpack.c.l.b16 %v273
        %v418 = vunpack.c.l.b16 %v274
        %v419 = vunpack.c.l.b16 %v275
        %v420 = vunpack.c.l.b16 %v276
        %v421 = vunpack.c.l.b16 %v277
        %v422 = vunpack.c.l.b16 %v278
        %v423 = vunpack.c.l.b16 %v279
        %v424 = vunpack.c.l.b16 %v280
        %v425 = vunpack.c.l.b16 %v281
        %v426 = vunpack.c.l.b16 %v282
        %v427 = vunpack.c.l.b16 %v283
        %v428 = vunpack.c.l.b16 %v284
        %v429 = vunpack.c.l.b16 %v285
        %v430 = vunpack.c.l.b16 %v286
        %v431 = vunpack.c.l.b16 %v287
        %v432 = vunpack.c.l.b16 %v288
        %v433 = vunpack.c.l.b16 %v289
        %v434 = vunpack.c.l.b16 %v290
        %v435 = vpack.c.b16 %v404, %v403
        %v436 = vpack.c.b16 %v406, %v405
        %v437 = vpack.c.b16 %v408, %v407
        %v438 = vpack.c.b16 %v410, %v409
        %v439 = vpack.c.b16 %v412, %v411
        %v440 = vpack.c.b16 %v414, %v413
        %v441 = vpack.c.b16 %v416, %v415
        %v442 = vpack.c.b16 %v418, %v417
        %v443 = vpack.c.b16 %v420, %v419
        %v444 = vpack.c.b16 %v422, %v421
        %v445 = vpack.c.b16 %v424, %v423
        %v446 = vpack.c.b16 %v426, %v425
        %v447 = vpack.c.b16 %v428, %v427
        %v448 = vpack.c.b16 %v430, %v429
        %v449 = vpack.c.b16 %v432, %v431
        %v450 = vpack.c.b16 %v434, %v433
        %467 = vmatprep.subr.bf16.mxu0 0
        %468 = vmatpush1.bf16.msra.mxu0 %v442
        %469 = vmatprep.subr.bf16.mxu0 0
        %470 = vmatpush1.bf16.msra.mxu0 %v441
        %471 = vmatprep.subr.bf16.mxu0 0
        %472 = vmatpush1.bf16.msra.mxu0 %v440
        %473 = vmatprep.subr.bf16.mxu0 0
        %474 = vmatpush1.bf16.msra.mxu0 %v439
        %475 = vmatprep.subr.bf16.mxu0 0
        %476 = vmatpush1.bf16.msra.mxu0 %v438
        %477 = vmatprep.subr.bf16.mxu0 0
        %478 = vmatpush1.bf16.msra.mxu0 %v437
        %479 = vmatprep.subr.bf16.mxu0 0
        %480 = vmatpush1.bf16.msra.mxu0 %v436
        %481 = vmatprep.subr.bf16.mxu0 0
        %482 = vmatpush1.bf16.msra.mxu0 %v435
        %483 = vmatprep.subr.bf16.mxu0 0
        %484 = vmatpush2.bf16.msra.mxu0 %v450
        %485 = vmatprep.subr.bf16.mxu0 0
        %486 = vmatpush2.bf16.msra.mxu0 %v449
        %487 = vmatprep.subr.bf16.mxu0 0
        %488 = vmatpush2.bf16.msra.mxu0 %v448
        %489 = vmatprep.subr.bf16.mxu0 0
        %490 = vmatpush2.bf16.msra.mxu0 %v447
        %491 = vmatprep.subr.bf16.mxu0 0
        %492 = vmatpush2.bf16.msra.mxu0 %v446
        %493 = vmatprep.subr.bf16.mxu0 0
        %494 = vmatpush2.bf16.msra.mxu0 %v445
        %495 = vmatprep.subr.bf16.mxu0 0
        %496 = vmatpush2.bf16.msra.mxu0 %v444
        %497 = vmatprep.subr.bf16.mxu0 0
        %498 = vmatpush2.bf16.msra.mxu0 %v443
        %499 = vmatprep.mubr.bf16.mxu0 %v340
        %500 = vmatmul.mubr.bf16.gmra.mxu0 %v339
        %v501 = vpop.f32.mrf.mxu0
        %v502 = vadd.f32 0.0, %v501
        %v503 = vpop.f32.mrf.mxu0
        %v504 = vpop.f32.mrf.mxu0
        %v505 = vadd.f32 0.0, %v504
        %v506 = vpop.f32.mrf.mxu0
        %507 = vmatprep.mubr.bf16.mxu0 %v342
        %508 = vmatmul.mubr.bf16.gmra.mxu0 %v341
        %v509 = vpop.f32.mrf.mxu0
        %v510 = vadd.f32 0.0, %v509
        %v511 = vpop.f32.mrf.mxu0
        %v512 = vpop.f32.mrf.mxu0
        %v513 = vadd.f32 0.0, %v512
        %v514 = vpop.f32.mrf.mxu0
        %515 = vmatprep.mubr.bf16.mxu0 %v344
        %516 = vmatmul.mubr.bf16.gmra.mxu0 %v343
        %v517 = vpop.f32.mrf.mxu0
        %v518 = vadd.f32 0.0, %v517
        %v519 = vpop.f32.mrf.mxu0
        %v520 = vpop.f32.mrf.mxu0
        %v521 = vadd.f32 0.0, %v520
        %v522 = vpop.f32.mrf.mxu0
        %523 = vmatprep.mubr.bf16.mxu0 %v346
        %524 = vmatmul.mubr.bf16.gmra.mxu0 %v345
        %v525 = vpop.f32.mrf.mxu0
        %v526 = vadd.f32 0.0, %v525
        %v527 = vpop.f32.mrf.mxu0
        %v528 = vpop.f32.mrf.mxu0
        %v529 = vadd.f32 0.0, %v528
        %v530 = vpop.f32.mrf.mxu0
        %531 = vmatprep.mubr.bf16.mxu0 %v348
        %532 = vmatmul.mubr.bf16.gmra.mxu0 %v347
        %v533 = vpop.f32.mrf.mxu0
        %v534 = vadd.f32 0.0, %v533
        %v535 = vpop.f32.mrf.mxu0
        %v536 = vpop.f32.mrf.mxu0
        %v537 = vadd.f32 0.0, %v536
        %v538 = vpop.f32.mrf.mxu0
        %539 = vmatprep.mubr.bf16.mxu0 %v350
        %540 = vmatmul.mubr.bf16.gmra.mxu0 %v349
        %v541 = vpop.f32.mrf.mxu0
        %v542 = vadd.f32 0.0, %v541
        %v543 = vpop.f32.mrf.mxu0
        %v544 = vpop.f32.mrf.mxu0
        %v545 = vadd.f32 0.0, %v544
        %v546 = vpop.f32.mrf.mxu0
        %547 = vmatprep.mubr.bf16.mxu0 %v352
        %548 = vmatmul.mubr.bf16.gmra.mxu0 %v351
        %v549 = vpop.f32.mrf.mxu0
        %v550 = vadd.f32 0.0, %v549
        %v551 = vpop.f32.mrf.mxu0
        %v552 = vpop.f32.mrf.mxu0
        %v553 = vadd.f32 0.0, %v552
        %v554 = vpop.f32.mrf.mxu0
        %555 = vmatprep.mubr.bf16.mxu0 %v354
        %556 = vmatmul.mubr.bf16.gmra.mxu0 %v353
        %v557 = vpop.f32.mrf.mxu0
        %v558 = vadd.f32 0.0, %v557
        %v559 = vpop.f32.mrf.mxu0
        %v560 = vpop.f32.mrf.mxu0
        %v561 = vadd.f32 0.0, %v560
        %v562 = vpop.f32.mrf.mxu0
        %563 = vdwg.mxu0
        %v564 = vadd.f32 %v227, %v502
        %v565 = vadd.f32 %v228, %v505
        %v566 = vadd.f32 %v229, %v510
        %v567 = vadd.f32 %v230, %v513
        %v568 = vadd.f32 %v231, %v518
        %v569 = vadd.f32 %v232, %v521
        %v570 = vadd.f32 %v233, %v526
        %v571 = vadd.f32 %v234, %v529
        %v572 = vadd.f32 %v235, %v534
        %v573 = vadd.f32 %v236, %v537
        %v574 = vadd.f32 %v237, %v542
        %v575 = vadd.f32 %v238, %v545
        %v576 = vadd.f32 %v239, %v550
        %v577 = vadd.f32 %v240, %v553
        %v578 = vadd.f32 %v241, %v558
        %v579 = vadd.f32 %v242, %v561
        %580 = vst [vmem:[#allocation2] sm:$0xff] %v564
        %581 = vst [vmem:[#allocation2 + $0x8] sm:$0xff] %v565
        %582 = vst [vmem:[#allocation2 + $0x10] sm:$0xff] %v566
        %583 = vst [vmem:[#allocation2 + $0x18] sm:$0xff] %v567
        %584 = vst [vmem:[#allocation2 + $0x20] sm:$0xff] %v568
        %585 = vst [vmem:[#allocation2 + $0x28] sm:$0xff] %v569
        %586 = vst [vmem:[#allocation2 + $0x30] sm:$0xff] %v570
        %587 = vst [vmem:[#allocation2 + $0x38] sm:$0xff] %v571
        %588 = vst [vmem:[#allocation2 + $0x40] sm:$0xff] %v572
        %589 = vst [vmem:[#allocation2 + $0x48] sm:$0xff] %v573
        %590 = vst [vmem:[#allocation2 + $0x50] sm:$0xff] %v574
        %591 = vst [vmem:[#allocation2 + $0x58] sm:$0xff] %v575
        %592 = vst [vmem:[#allocation2 + $0x60] sm:$0xff] %v576
        %593 = vst [vmem:[#allocation2 + $0x68] sm:$0xff] %v577
        %594 = vst [vmem:[#allocation2 + $0x70] sm:$0xff] %v578
        %595 = vst [vmem:[#allocation2 + $0x78] sm:$0xff] %v579
        // Predicated region
        $region41: #{tpu_custom_call.1} parent=27 // pred_check
          %p596 = pneg %p207
        $region42: #{tpu_custom_call.1} parent=27 // pred_check_branch
          %598 = sbr.rel (%p596) target = $region44
        $region43: #{tpu_custom_call.1} parent=27 // pred_region
          %v599 = vld [vmem:[#allocation2] sm:$0xff]
          %v600 = vld [vmem:[#allocation2 + $0x8] sm:$0xff]
          %v601 = vld [vmem:[#allocation2 + $0x10] sm:$0xff]
          %v602 = vld [vmem:[#allocation2 + $0x18] sm:$0xff]
          %v603 = vld [vmem:[#allocation2 + $0x20] sm:$0xff]
          %v604 = vld [vmem:[#allocation2 + $0x28] sm:$0xff]
          %v605 = vld [vmem:[#allocation2 + $0x30] sm:$0xff]
          %v606 = vld [vmem:[#allocation2 + $0x38] sm:$0xff]
          %v607 = vld [vmem:[#allocation2 + $0x40] sm:$0xff]
          %v608 = vld [vmem:[#allocation2 + $0x48] sm:$0xff]
          %v609 = vld [vmem:[#allocation2 + $0x50] sm:$0xff]
          %v610 = vld [vmem:[#allocation2 + $0x58] sm:$0xff]
          %v611 = vld [vmem:[#allocation2 + $0x60] sm:$0xff]
          %v612 = vld [vmem:[#allocation2 + $0x68] sm:$0xff]
          %v613 = vld [vmem:[#allocation2 + $0x70] sm:$0xff]
          %v614 = vld [vmem:[#allocation2 + $0x78] sm:$0xff]
          %v615 = vpack.c.bf16 %v600, %v599
          %v616 = vpack.c.bf16 %v602, %v601
          %v617 = vpack.c.bf16 %v604, %v603
          %v618 = vpack.c.bf16 %v606, %v605
          %v619 = vpack.c.bf16 %v608, %v607
          %v620 = vpack.c.bf16 %v610, %v609
          %v621 = vpack.c.bf16 %v612, %v611
          %v622 = vpack.c.bf16 %v614, %v613
          %v631 = vunpack.c.l.b16 %v615
          %v632 = vunpack.c.h.b16 %v615
          %v633 = vunpack.c.l.b16 %v616
          %v634 = vunpack.c.h.b16 %v616
          %v635 = vunpack.c.l.b16 %v617
          %v636 = vunpack.c.h.b16 %v617
          %v637 = vunpack.c.l.b16 %v618
          %v638 = vunpack.c.h.b16 %v618
          %v639 = vunpack.c.l.b16 %v619
          %v640 = vunpack.c.h.b16 %v619
          %v641 = vunpack.c.l.b16 %v620
          %v642 = vunpack.c.h.b16 %v620
          %v643 = vunpack.c.l.b16 %v621
          %v644 = vunpack.c.h.b16 %v621
          %v645 = vunpack.c.l.b16 %v622
          %v646 = vunpack.c.h.b16 %v622
          %v647 = vpack.c.b16 %v631, %v631
          %v648 = vpack.c.b16 %v632, %v632
          %v649 = vpack.c.b16 %v633, %v633
          %v650 = vpack.c.b16 %v634, %v634
          %v651 = vpack.c.b16 %v635, %v635
          %v652 = vpack.c.b16 %v636, %v636
          %v653 = vpack.c.b16 %v637, %v637
          %v654 = vpack.c.b16 %v638, %v638
          %v655 = vpack.c.b16 %v639, %v639
          %v656 = vpack.c.b16 %v640, %v640
          %v657 = vpack.c.b16 %v641, %v641
          %v658 = vpack.c.b16 %v642, %v642
          %v659 = vpack.c.b16 %v643, %v643
          %v660 = vpack.c.b16 %v644, %v644
          %v661 = vpack.c.b16 %v645, %v645
          %v662 = vpack.c.b16 %v646, %v646
          %679 = vst [vmem:[%s201] sm:$0xf] %v647
          %680 = vst [vmem:[%s201 + $0x4] sm:$0xf] %v648
          %681 = vst [vmem:[%s201 + $0x8] sm:$0xf] %v649
          %682 = vst [vmem:[%s201 + $0xc] sm:$0xf] %v650
          %683 = vst [vmem:[%s201 + $0x10] sm:$0xf] %v651
          %684 = vst [vmem:[%s201 + $0x14] sm:$0xf] %v652
          %685 = vst [vmem:[%s201 + $0x18] sm:$0xf] %v653
          %686 = vst [vmem:[%s201 + $0x1c] sm:$0xf] %v654
          %687 = vst [vmem:[%s201 + $0x20] sm:$0xf] %v655
          %688 = vst [vmem:[%s201 + $0x24] sm:$0xf] %v656
          %689 = vst [vmem:[%s201 + $0x28] sm:$0xf] %v657
          %690 = vst [vmem:[%s201 + $0x2c] sm:$0xf] %v658
          %691 = vst [vmem:[%s201 + $0x30] sm:$0xf] %v659
          %692 = vst [vmem:[%s201 + $0x34] sm:$0xf] %v660
          %693 = vst [vmem:[%s201 + $0x38] sm:$0xf] %v661
          %694 = vst [vmem:[%s201 + $0x3c] sm:$0xf] %v662
        $region44: #{tpu_custom_call.1} parent=27 // pred_fallthru
          _
        %s695 = sand.u32 %s94, 1
        %s696 = scalar_lea.sflag [#allocation5], %s695
        %s697 = sand.u32 %s94, 1
        %s698 = smul.addr %s697, 64
        %s699 = scalar_lea.vmem [#allocation8], %s698
        // Predicated region
        $region45: #{tpu_custom_call.1} parent=27 // pred_check
          %p700 = pneg %p104
        $region46: #{tpu_custom_call.1} parent=27 // pred_check_branch
          %702 = sbr.rel (%p700) target = $region48
        $region47: #{tpu_custom_call.1} parent=27 // pred_region
          %s703 = smul.u32 16, %s24
          %s705 = ssub.s32 1024, 1024
          %706 = vsyncadd %s696, %s705
          %s707 = smul.addr %s703, 64
          %s708 = scalar_lea.hbm %s2, %s707
          %s709 = sshll.u32 %s699, 4
          %s710 = int_to_ptr.vmem [resolvable:$true] %s709
          %715 = dma.vmem_to_hbm [thread:$0]  %s710, 1024, %s708, %s696, 64, 64, 4
        $region48: #{tpu_custom_call.1} parent=27 // pred_fallthru
          _
      $region28: #{tpu_custom_call.1} parent=5 // pred_fallthru
        _
      %p716 = scmp.le.s32.totalorder 2, %s15
      // Predicated region
      $region49: #{tpu_custom_call.1} parent=5 // pred_check
        %p717 = pneg %p716
      $region50: #{tpu_custom_call.1} parent=5 // pred_check_branch
        %719 = sbr.rel (%p717) target = $region52
      $region51: #{tpu_custom_call.1} parent=5 // pred_region
        %s720 = ssub.s32 %s15, 2
        // Predicated region
        $region53: #{tpu_custom_call.1} parent=51 // pred_check
          %p721 = pneg %p110
        $region54: #{tpu_custom_call.1} parent=51 // pred_check_branch
          %723 = sbr.rel (%p721) target = $region56
        $region55: #{tpu_custom_call.1} parent=51 // pred_region
          %s724 = sand.u32 %s95, 1
          %s725 = scalar_lea.sflag [#allocation5], %s724
          %s726 = sand.u32 %s95, 1
          %s727 = smul.addr %s726, 64
          %s728 = scalar_lea.vmem [#allocation8], %s727
          %729 = dma.done %s725, 1024
        $region56: #{tpu_custom_call.1} parent=51 // pred_fallthru
          _
      $region52: #{tpu_custom_call.1} parent=5 // pred_fallthru
        _
    $region6: #{tpu_custom_call.1} parent=1 // loop_footer
      %s19 = sadd.s32 1, %s15
    $region7: #{tpu_custom_call.1} parent=1 // loop_footer_branch
      %14 = sbr.rel target = $region3
    $region8: #{tpu_custom_call.1} parent=1 // loop_exit
      _
    %730 = vsyncpa [#allocation4], 1
    %s731 = scalar_lea.sflag [#allocation4], 1
    %732 = vsyncpa %s731, 1
    %733 = vsyncpa [#allocation7], 1
    %734 = vsyncpa [#allocation5], 1
    %s735 = scalar_lea.sflag [#allocation5], 1
    %736 = vsyncpa %s735, 1

</llo_original>
